<compile_context>
chip_gen: v7x
topology: tpu7x:2x2x1
jax: 0.10.0
libtpu: 0.0.40
codegen_flags: <defaults>
</compile_context>

<pallas_src>
import functools

import jax
import jax.numpy as jnp
from jax.experimental import pallas as pl
from jax.experimental.pallas import tpu as pltpu

_LANES = (1024, 512, 256, 128)      # candidate lane widths (multiples of 128)
_DEFAULT_TILE_BYTES = 2 << 20       # ~2 MiB per input tile (safe on all gens)
_VMEM_LIMIT_BYTES = 48 << 20        # fits v7x's 64 MiB; plenty on v5e/v6e


def _cdiv(a, b):
    return -(-a // b)


def _round_up(x, m):
    return ((x + m - 1) // m) * m


def _custom_loss_kernel(pred_ref, true_ref, inter_ref, union_ref, bce_ref, *,
                        rows, tr, ipc, fold_rows, need_row_mask,
                        binary_targets):
    c = pl.program_id(1)   # parallel chunk axis
    j = pl.program_id(2)   # inner reduction axis (output slabs are resident)

    @pl.when(j == 0)
    def _():
        inter_ref[...] = jnp.zeros_like(inter_ref)
        union_ref[...] = jnp.zeros_like(union_ref)
        bce_ref[...] = jnp.zeros_like(bce_ref)

    p = pred_ref[...].astype(jnp.float32)   # (bb, tr, lane)
    t = true_ref[...].astype(jnp.float32)
    bb, _, lane = p.shape

    if need_row_mask:
        # Logical (unclamped) first row of this tile.  Rows at/after `rows`
        # hold garbage (partial DMA / clamped idle step) -> force p = t = 0,
        # which makes every term below contribute exactly 0.
        valid = rows - (c * ipc + j) * tr          # may be <= 0 (idle step)
        row_ids = jax.lax.broadcasted_iota(jnp.int32, p.shape, 1)
        keep = row_ids < valid
        p = jnp.where(keep, p, 0.0)
        t = jnp.where(keep, t, 0.0)

    def fold(x):
        # (bb, tr, lane) -> (bb, fold_rows, lane) partial sums.
        if fold_rows == 8:
            # Sublane-group fold: pure vector adds, no cross-lane XLU.
            return jnp.sum(x.reshape(bb, -1, 8, lane), axis=1)
        return jnp.sum(x, axis=1, keepdims=True)

    inter_ref[...] += fold(t * p)
    union_ref[...] += fold(t + p)

    # BCE (nn.BCELoss clamps log terms at -100).  We accumulate the positive
    # quantity and negate once in the wrapper.
    if binary_targets:
        # One EUP log per element (exact only for hard 0/1 targets).
        bce_term = jnp.maximum(jnp.log(jnp.where(t > 0.5, p, 1.0 - p)), -100.0)
    else:
        log_p = jnp.maximum(jnp.log(p), -100.0)
        log_1mp = jnp.maximum(jnp.log(1.0 - p), -100.0)
        bce_term = log_1mp + t * (log_p - log_1mp)
    bce_ref[...] += fold(bce_term)


def custom_loss(y_pred, y_true, epsilon=1e-6, *, binary_targets=False,
                tile_bytes=_DEFAULT_TILE_BYTES):
    """0.5 * SoftDice + 0.5 * BCE for (B, ...) inputs.  Returns a scalar."""
    assert y_pred.shape == y_true.shape
    b = y_pred.shape[0]
    n = 1
    for d in y_pred.shape[1:]:
        n *= int(d)

    pred = y_pred.reshape(b, n)
    true = y_true.reshape(b, n)

    # ---- Lane selection: avoid any pad/copy whenever a lane width divides n.
    lane = None
    for cand in _LANES:                       # prefer rows % 8 == 0 (VPU fold)
        if n % cand == 0 and (n // cand) % 8 == 0:
            lane = cand
            break
    if lane is None:
        for cand in _LANES:
            if n % cand == 0:
                lane = cand
                break
    if lane is None:
        # TODO(synk): a flat-layout masked kernel would avoid this full-array
        # pad copy for n % 128 != 0; for now pad to the next multiple of 128.
        lane = 128
        n_pad = _round_up(n, lane)
        pred = jnp.pad(pred, ((0, 0), (0, n_pad - n)))
        true = jnp.pad(true, ((0, 0), (0, n_pad - n)))
    rows = pred.shape[1] // lane
    pred = pred.reshape(b, rows, lane)
    true = true.reshape(b, rows, lane)

    # ---- Tile sizing by bytes (dtype aware), batch packing, chunk split.
    itemsize = jnp.dtype(y_pred.dtype).itemsize
    budget_rows = max(8, (tile_bytes // (lane * itemsize)) // 8 * 8)

    if rows <= budget_rows:
        tr = rows                                   # full-dim block (always ok)
        bb = max(1, min(b, budget_rows // max(rows, 1)))
        while b % bb:                               # keep batch blocks unragged
            bb -= 1
    else:
        k = _cdiv(rows, budget_rows)                # minimum #tiles per sample
        tr = _round_up(_cdiv(rows, k), 8)           # minimize row overhang
        bb = 1
    num_rt = _cdiv(rows, tr)
    num_bblocks = b // bb

    # v7x megacore: guarantee >=2 parallel grid units when the batch axis
    # alone cannot provide them (no effect on 1-TC v5e/v6e).
    n_chunks = 2 if (num_bblocks == 1 and num_rt >= 2) else 1
    ipc = _cdiv(num_rt, n_chunks)                   # inner tiles per chunk
    need_row_mask = (n_chunks * ipc * tr) != rows
    fold_rows = 8 if tr % 8 == 0 else 1

    kernel = functools.partial(
        _custom_loss_kernel, rows=rows, tr=tr, ipc=ipc, fold_rows=fold_rows,
        need_row_mask=need_row_mask, binary_targets=binary_targets)

    def in_index(bi, c, j):
        # Clamp idle tail steps of the chunk split onto the last real block;
        # their contribution is zeroed by the in-kernel row mask.
        rb = jnp.minimum(c * ipc + j, num_rt - 1)
        return (bi, rb, 0)

    in_spec = pl.BlockSpec((bb, tr, lane), in_index)
    out_spec = pl.BlockSpec((bb, pl.Squeezed(), fold_rows, lane),
                            lambda bi, c, j: (bi, c, 0, 0))
    part = jax.ShapeDtypeStruct((b, n_chunks, fold_rows, lane), jnp.float32)

    inter, union, bce_sum = pl.pallas_call(
        kernel,
        out_shape=(part, part, part),
        grid_spec=pl.GridSpec(
            grid=(num_bblocks, n_chunks, ipc),
            in_specs=[in_spec, in_spec],
            out_specs=(out_spec, out_spec, out_spec),
        ),
        compiler_params=pltpu.CompilerParams(
            dimension_semantics=("parallel", "parallel", "arbitrary"),
            vmem_limit_bytes=_VMEM_LIMIT_BYTES),
    )(pred, true)

    # Final tiny reductions + normalization in plain JAX.
    inter_s = jnp.sum(inter.reshape(b, -1), axis=1)
    union_s = jnp.sum(union.reshape(b, -1), axis=1)
    dice_score = 2.0 * inter_s / (union_s + epsilon)
    dice_loss = jnp.mean(1.0 - dice_score)
    bce_loss = -jnp.sum(bce_sum) / (b * n)
    return 0.5 * dice_loss + 0.5 * bce_loss


def _reference_loss(y_pred, y_true, epsilon=1e-6):
    """Pure-JAX reference reproducing the PyTorch module semantics."""
    b = y_pred.shape[0]
    p = y_pred.reshape(b, -1).astype(jnp.float32)
    t = y_true.reshape(b, -1).astype(jnp.float32)
    inter = jnp.sum(t * p, axis=1)
    union = jnp.sum(t, axis=1) + jnp.sum(p, axis=1)
    dice = 2.0 * inter / (union + epsilon)
    dice_loss = jnp.mean(1.0 - dice)
    log_p = jnp.maximum(jnp.log(p), -100.0)
    log_1mp = jnp.maximum(jnp.log(1.0 - p), -100.0)
    bce_loss = jnp.mean(-(t * log_p + (1.0 - t) * log_1mp))
    return 0.5 * dice_loss + 0.5 * bce_loss


if __name__ == "__main__":
    key = jax.random.PRNGKey(0)
    k1, k2, k3, k4 = jax.random.split(key, 4)

    # Case 1: demo shape (2, 4, 16, 16) -> lane=128, rows=8, zero padding.
    B, C, H, W = 2, 4, 16, 16
    y_pred = jax.nn.sigmoid(jax.random.normal(k1, (B, C, H, W), jnp.float32))
    y_true = (jax.random.uniform(k2, (B, C, H, W)) > 0.5).astype(jnp.float32)
    loss = jax.block_until_ready(custom_loss(y_pred, y_true))
    ref = _reference_loss(y_pred, y_true)
    assert jnp.allclose(loss, ref, rtol=1e-4, atol=1e-6), (loss, ref)

    # Case 2: single-log BCE fast path (targets are hard 0/1 here).
    loss_bin = jax.block_until_ready(
        custom_loss(y_pred, y_true, binary_targets=True))
    assert jnp.allclose(loss_bin, ref, rtol=1e-4, atol=1e-6), (loss_bin, ref)

    # Case 3: non-128-aligned n (B=1) -> minimal-pad fallback, full-dim tile.
    yp3 = jax.nn.sigmoid(jax.random.normal(k3, (1, 5, 24, 24), jnp.float32))
    yt3 = (jax.random.uniform(k4, (1, 5, 24, 24)) > 0.5).astype(jnp.float32)
    loss3 = jax.block_until_ready(custom_loss(yp3, yt3))
    ref3 = _reference_loss(yp3, yt3)
    assert jnp.allclose(loss3, ref3, rtol=1e-4, atol=1e-6), (loss3, ref3)

    # Case 4: tiny tile budget -> exercises ragged-row masking, the 2-way
    # parallel chunk split (v7x path) and the clamped idle tail step.
    loss4 = jax.block_until_ready(custom_loss(yp3, yt3, tile_bytes=4096))
    assert jnp.allclose(loss4, ref3, rtol=1e-4, atol=1e-6), (loss4, ref3)

    # Case 5: bf16 inputs stay in native dtype in HBM (cast per tile in VMEM).
    yp5 = y_pred.astype(jnp.bfloat16)
    yt5 = y_true.astype(jnp.bfloat16)
    loss5 = jax.block_until_ready(custom_loss(yp5, yt5))
    ref5 = _reference_loss(yp5, yt5)
    assert jnp.allclose(loss5, ref5, rtol=1e-4, atol=1e-6), (loss5, ref5)

    print("KERNEL_OK")
</pallas_src>

<mosaic_0001>
module attributes {stable_mosaic.version = 11 : i64} {
  func.func @_custom_loss_kernel(%arg0: i32, %arg1: i32, %arg2: i32, %arg3: memref<2x8x128xf32, #tpu.memory_space<vmem>>, %arg4: memref<2x8x128xf32, #tpu.memory_space<vmem>>, %arg5: memref<2x1x8x128xf32, #tpu.memory_space<vmem>>, %arg6: memref<2x1x8x128xf32, #tpu.memory_space<vmem>>, %arg7: memref<2x1x8x128xf32, #tpu.memory_space<vmem>>) attributes {dimension_semantics = [#tpu.dimension_semantics<parallel>, #tpu.dimension_semantics<parallel>, #tpu.dimension_semantics<arbitrary>], iteration_bounds = array<i64: 1, 1, 1>, scalar_prefetch = 0 : i64, scratch_operands = 0 : i64, tpu.core_type = #tpu.core_type<tc>, window_params = [{transform_indices = @transform_0, window_bounds = array<i64: 2, 8, 128>}, {transform_indices = @transform_1, window_bounds = array<i64: 2, 8, 128>}, {transform_indices = @transform_2, window_bounds = array<i64: 2, 1, 8, 128>}, {transform_indices = @transform_3, window_bounds = array<i64: 2, 1, 8, 128>}, {transform_indices = @transform_4, window_bounds = array<i64: 2, 1, 8, 128>}]} {
    %c0_i32 = arith.constant 0 : i32
    %0 = arith.cmpi eq, %arg2, %c0_i32 : i32
    %1 = arith.extui %0 : i1 to i32
    %c0_i32_0 = arith.constant 0 : i32
    %2 = arith.cmpi ne, %1, %c0_i32_0 : i32
    scf.if %2 {
      %cst_35 = arith.constant 0.000000e+00 : f32
      %42 = vector.broadcast %cst_35 : f32 to vector<2x8x128xf32>
      %c0_36 = arith.constant 0 : index
      %c0_37 = arith.constant 0 : index
      %c0_38 = arith.constant 0 : index
      %c0_39 = arith.constant 0 : index
      %43 = vector.load %arg5[%c0_36, %c0_37, %c0_38, %c0_39] : memref<2x1x8x128xf32, #tpu.memory_space<vmem>>, vector<2x1x8x128xf32>
      %44 = vector.shape_cast %43 : vector<2x1x8x128xf32> to vector<2x8x128xf32>
      %45 = vector.shape_cast %42 : vector<2x8x128xf32> to vector<2x1x8x128xf32>
      tpu.vector_store %arg5[%c0_36, %c0_37, %c0_38, %c0_39], %45 {strides = array<i32>} : memref<2x1x8x128xf32, #tpu.memory_space<vmem>>, vector<2x1x8x128xf32>,
      %cst_40 = arith.constant 0.000000e+00 : f32
      %46 = vector.broadcast %cst_40 : f32 to vector<2x8x128xf32>
      %c0_41 = arith.constant 0 : index
      %c0_42 = arith.constant 0 : index
      %c0_43 = arith.constant 0 : index
      %c0_44 = arith.constant 0 : index
      %47 = vector.load %arg6[%c0_41, %c0_42, %c0_43, %c0_44] : memref<2x1x8x128xf32, #tpu.memory_space<vmem>>, vector<2x1x8x128xf32>
      %48 = vector.shape_cast %47 : vector<2x1x8x128xf32> to vector<2x8x128xf32>
      %49 = vector.shape_cast %46 : vector<2x8x128xf32> to vector<2x1x8x128xf32>
      tpu.vector_store %arg6[%c0_41, %c0_42, %c0_43, %c0_44], %49 {strides = array<i32>} : memref<2x1x8x128xf32, #tpu.memory_space<vmem>>, vector<2x1x8x128xf32>,
      %cst_45 = arith.constant 0.000000e+00 : f32
      %50 = vector.broadcast %cst_45 : f32 to vector<2x8x128xf32>
      %c0_46 = arith.constant 0 : index
      %c0_47 = arith.constant 0 : index
      %c0_48 = arith.constant 0 : index
      %c0_49 = arith.constant 0 : index
      %51 = vector.load %arg7[%c0_46, %c0_47, %c0_48, %c0_49] : memref<2x1x8x128xf32, #tpu.memory_space<vmem>>, vector<2x1x8x128xf32>
      %52 = vector.shape_cast %51 : vector<2x1x8x128xf32> to vector<2x8x128xf32>
      %53 = vector.shape_cast %50 : vector<2x8x128xf32> to vector<2x1x8x128xf32>
      tpu.vector_store %arg7[%c0_46, %c0_47, %c0_48, %c0_49], %53 {strides = array<i32>} : memref<2x1x8x128xf32, #tpu.memory_space<vmem>>, vector<2x1x8x128xf32>,
    } else {
    }
    %c0 = arith.constant 0 : index
    %c0_1 = arith.constant 0 : index
    %c0_2 = arith.constant 0 : index
    %3 = vector.load %arg3[%c0, %c0_1, %c0_2] : memref<2x8x128xf32, #tpu.memory_space<vmem>>, vector<2x8x128xf32>
    %c0_3 = arith.constant 0 : index
    %c0_4 = arith.constant 0 : index
    %c0_5 = arith.constant 0 : index
    %4 = vector.load %arg4[%c0_3, %c0_4, %c0_5] : memref<2x8x128xf32, #tpu.memory_space<vmem>>, vector<2x8x128xf32>
    %c0_6 = arith.constant 0 : index
    %c0_7 = arith.constant 0 : index
    %c0_8 = arith.constant 0 : index
    %c0_9 = arith.constant 0 : index
    %5 = vector.load %arg5[%c0_6, %c0_7, %c0_8, %c0_9] : memref<2x1x8x128xf32, #tpu.memory_space<vmem>>, vector<2x1x8x128xf32>
    %6 = vector.shape_cast %5 : vector<2x1x8x128xf32> to vector<2x8x128xf32>
    %7 = arith.mulf %4, %3 : vector<2x8x128xf32>
    %8 = vector.shape_cast %7 : vector<2x8x128xf32> to vector<2x1x8x128xf32>
    %cst = arith.constant dense<0.000000e+00> : vector<2x8x128xf32>
    %9 = vector.multi_reduction <add>, %8, %cst [1] : vector<2x1x8x128xf32> to vector<2x8x128xf32>
    %10 = arith.addf %6, %9 : vector<2x8x128xf32>
    %c0_10 = arith.constant 0 : index
    %c0_11 = arith.constant 0 : index
    %c0_12 = arith.constant 0 : index
    %c0_13 = arith.constant 0 : index
    %11 = vector.load %arg5[%c0_10, %c0_11, %c0_12, %c0_13] : memref<2x1x8x128xf32, #tpu.memory_space<vmem>>, vector<2x1x8x128xf32>
    %12 = vector.shape_cast %11 : vector<2x1x8x128xf32> to vector<2x8x128xf32>
    %13 = vector.shape_cast %10 : vector<2x8x128xf32> to vector<2x1x8x128xf32>
    tpu.vector_store %arg5[%c0_10, %c0_11, %c0_12, %c0_13], %13 {strides = array<i32>} : memref<2x1x8x128xf32, #tpu.memory_space<vmem>>, vector<2x1x8x128xf32>,
    %c0_14 = arith.constant 0 : index
    %c0_15 = arith.constant 0 : index
    %c0_16 = arith.constant 0 : index
    %c0_17 = arith.constant 0 : index
    %14 = vector.load %arg6[%c0_14, %c0_15, %c0_16, %c0_17] : memref<2x1x8x128xf32, #tpu.memory_space<vmem>>, vector<2x1x8x128xf32>
    %15 = vector.shape_cast %14 : vector<2x1x8x128xf32> to vector<2x8x128xf32>
    %16 = arith.addf %4, %3 : vector<2x8x128xf32>
    %17 = vector.shape_cast %16 : vector<2x8x128xf32> to vector<2x1x8x128xf32>
    %cst_18 = arith.constant dense<0.000000e+00> : vector<2x8x128xf32>
    %18 = vector.multi_reduction <add>, %17, %cst_18 [1] : vector<2x1x8x128xf32> to vector<2x8x128xf32>
    %19 = arith.addf %15, %18 : vector<2x8x128xf32>
    %c0_19 = arith.constant 0 : index
    %c0_20 = arith.constant 0 : index
    %c0_21 = arith.constant 0 : index
    %c0_22 = arith.constant 0 : index
    %20 = vector.load %arg6[%c0_19, %c0_20, %c0_21, %c0_22] : memref<2x1x8x128xf32, #tpu.memory_space<vmem>>, vector<2x1x8x128xf32>
    %21 = vector.shape_cast %20 : vector<2x1x8x128xf32> to vector<2x8x128xf32>
    %22 = vector.shape_cast %19 : vector<2x8x128xf32> to vector<2x1x8x128xf32>
    tpu.vector_store %arg6[%c0_19, %c0_20, %c0_21, %c0_22], %22 {strides = array<i32>} : memref<2x1x8x128xf32, #tpu.memory_space<vmem>>, vector<2x1x8x128xf32>,
    %23 = math.log %3 : vector<2x8x128xf32>
    %cst_23 = arith.constant -1.000000e+02 : f32
    %24 = vector.broadcast %cst_23 : f32 to vector<2x8x128xf32>
    %25 = arith.maximumf %23, %24 : vector<2x8x128xf32>
    %cst_24 = arith.constant 1.000000e+00 : f32
    %26 = vector.broadcast %cst_24 : f32 to vector<2x8x128xf32>
    %27 = arith.subf %26, %3 : vector<2x8x128xf32>
    %28 = math.log %27 : vector<2x8x128xf32>
    %cst_25 = arith.constant -1.000000e+02 : f32
    %29 = vector.broadcast %cst_25 : f32 to vector<2x8x128xf32>
    %30 = arith.maximumf %28, %29 : vector<2x8x128xf32>
    %31 = arith.subf %25, %30 : vector<2x8x128xf32>
    %32 = arith.mulf %4, %31 : vector<2x8x128xf32>
    %33 = arith.addf %30, %32 : vector<2x8x128xf32>
    %c0_26 = arith.constant 0 : index
    %c0_27 = arith.constant 0 : index
    %c0_28 = arith.constant 0 : index
    %c0_29 = arith.constant 0 : index
    %34 = vector.load %arg7[%c0_26, %c0_27, %c0_28, %c0_29] : memref<2x1x8x128xf32, #tpu.memory_space<vmem>>, vector<2x1x8x128xf32>
    %35 = vector.shape_cast %34 : vector<2x1x8x128xf32> to vector<2x8x128xf32>
    %36 = vector.shape_cast %33 : vector<2x8x128xf32> to vector<2x1x8x128xf32>
    %cst_30 = arith.constant dense<0.000000e+00> : vector<2x8x128xf32>
    %37 = vector.multi_reduction <add>, %36, %cst_30 [1] : vector<2x1x8x128xf32> to vector<2x8x128xf32>
    %38 = arith.addf %35, %37 : vector<2x8x128xf32>
    %c0_31 = arith.constant 0 : index
    %c0_32 = arith.constant 0 : index
    %c0_33 = arith.constant 0 : index
    %c0_34 = arith.constant 0 : index
    %39 = vector.load %arg7[%c0_31, %c0_32, %c0_33, %c0_34] : memref<2x1x8x128xf32, #tpu.memory_space<vmem>>, vector<2x1x8x128xf32>
    %40 = vector.shape_cast %39 : vector<2x1x8x128xf32> to vector<2x8x128xf32>
    %41 = vector.shape_cast %38 : vector<2x8x128xf32> to vector<2x1x8x128xf32>
    tpu.vector_store %arg7[%c0_31, %c0_32, %c0_33, %c0_34], %41 {strides = array<i32>} : memref<2x1x8x128xf32, #tpu.memory_space<vmem>>, vector<2x1x8x128xf32>,
    return
  }
  func.func @transform_0(%arg0: i32, %arg1: i32, %arg2: i32) -> (i32, i32, i32) {
    %c1_i32 = arith.constant 1 : i32
    %0 = arith.muli %arg1, %c1_i32 : i32
    %1 = arith.addi %0, %arg2 : i32
    %c0_i32 = arith.constant 0 : i32
    %2 = arith.minsi %1, %c0_i32 : i32
    %c0_i32_0 = arith.constant 0 : i32
    %c0_i32_1 = arith.constant 0 : i32
    return %arg0, %2, %c0_i32_0 : i32, i32, i32
  }
  func.func @transform_1(%arg0: i32, %arg1: i32, %arg2: i32) -> (i32, i32, i32) {
    %c1_i32 = arith.constant 1 : i32
    %0 = arith.muli %arg1, %c1_i32 : i32
    %1 = arith.addi %0, %arg2 : i32
    %c0_i32 = arith.constant 0 : i32
    %2 = arith.minsi %1, %c0_i32 : i32
    %c0_i32_0 = arith.constant 0 : i32
    %c0_i32_1 = arith.constant 0 : i32
    return %arg0, %2, %c0_i32_0 : i32, i32, i32
  }
  func.func @transform_2(%arg0: i32, %arg1: i32, %arg2: i32) -> (i32, i32, i32, i32) {
    %c0_i32 = arith.constant 0 : i32
    %c0_i32_0 = arith.constant 0 : i32
    %c0_i32_1 = arith.constant 0 : i32
    return %arg0, %arg1, %c0_i32, %c0_i32_0 : i32, i32, i32, i32
  }
  func.func @transform_3(%arg0: i32, %arg1: i32, %arg2: i32) -> (i32, i32, i32, i32) {
    %c0_i32 = arith.constant 0 : i32
    %c0_i32_0 = arith.constant 0 : i32
    %c0_i32_1 = arith.constant 0 : i32
    return %arg0, %arg1, %c0_i32, %c0_i32_0 : i32, i32, i32, i32
  }
  func.func @transform_4(%arg0: i32, %arg1: i32, %arg2: i32) -> (i32, i32, i32, i32) {
    %c0_i32 = arith.constant 0 : i32
    %c0_i32_0 = arith.constant 0 : i32
    %c0_i32_1 = arith.constant 0 : i32
    return %arg0, %arg1, %c0_i32, %c0_i32_0 : i32, i32, i32, i32
  }
}

</mosaic_0001>

<llo_original>
// kernel: tpu_custom_call.1
$region0: #{tpu_custom_call.1}
  #allocation0 [shape = 'u32[]', space=smem, size = 0x4, offset = 0x4, fixed_abs, tag = 'smem constant byte address 0x4 - core index']
  #allocation1 [shape = 'u32[144,128]{1,0:T(1,128)}', space=vmem, size = 0x12000, scoped, tag = 'internal scratch']
  %s0 = inlined_call_operand.hbm [shape: f32[2,8,128], index: 0, kind: input, shape index: {}]
  %s1 = inlined_call_operand.hbm [shape: f32[2,8,128], index: 1, kind: input, shape index: {}]
  %s2 = inlined_call_operand.hbm [shape: f32[2,1,8,128], index: 2, kind: output, shape index: {0}]
  %s3 = inlined_call_operand.hbm [shape: f32[2,1,8,128], index: 3, kind: output, shape index: {1}]
  %s4 = inlined_call_operand.hbm [shape: f32[2,1,8,128], index: 4, kind: output, shape index: {2}]
  %5 = xla_tuple %s2, %s3, %s4
  %s6 = sld [smem:[#allocation0]]
  $region46: #{tpu_custom_call.1} parent=0
    _
  %s8 = ssub.s32 1, %s6
  %s9 = scalar_select 0, %s8, %s6
  $region1: #{tpu_custom_call.1} parent=0
    #allocation2 [shape = 'u8[8192]{0}', space=vmem, size = 0x2000, scoped, tag = 'input window, operand 0, single buffered']
    #allocation3 [shape = 's32[1]{0}', space=sflag, size = 0x4, scoped, tag = 'scoped memory for tpu_custom_call.1']
    #allocation4 [shape = 's32[1]{0}', space=sflag, size = 0x4, scoped, tag = 'scoped memory for tpu_custom_call.1']
    #allocation5 [shape = 'u8[8192]{0}', space=vmem, size = 0x2000, scoped, tag = 'input window, operand 1, single buffered']
    #allocation6 [shape = 's32[1]{0}', space=sflag, size = 0x4, scoped, tag = 'scoped memory for tpu_custom_call.1']
    #allocation7 [shape = 'u8[8192]{0}', space=vmem, size = 0x2000, scoped, tag = 'output window, operand 0, single buffered']
    #allocation8 [shape = 'u8[8192]{0}', space=vmem, size = 0x2000, scoped, tag = 'output window, operand 1, single buffered']
    #allocation9 [shape = 's32[1]{0}', space=sflag, size = 0x4, scoped, tag = 'scoped memory for tpu_custom_call.1']
    #allocation10 [shape = 'u8[8192]{0}', space=vmem, size = 0x2000, scoped, tag = 'output window, operand 2, single buffered']
    %10 = vsyncpa [#allocation3], 0
    %11 = vsyncpa [#allocation6], 0
    %12 = vsyncpa [#allocation4], 0
    %13 = vsyncpa [#allocation9], 0
    // Predicated region
    $region2: #{tpu_custom_call.1} parent=1 // pred_check
      _
    $region3: #{tpu_custom_call.1} parent=1 // pred_check_branch
      %15 = sbr.rel (0) target = $region5
    $region4: #{tpu_custom_call.1} parent=1 // pred_region
      %s16 = sadd.s32 0, 0
      %p17 = scmp.lt.s32.totalorder %s16, 0
      %s18 = scalar_select %p17, %s16, 0
      %s20 = ssub.s32 256, 256
      %21 = vsyncadd [#allocation3], %s20
      %s22 = smul.addr %s18, 128
      %s23 = scalar_lea.hbm %s0, %s22
      %s24 = sshll.u32 [#allocation2], 4
      %s25 = int_to_ptr.vmem [resolvable:$true] %s24
      %30 = dma.hbm_to_vmem [thread:$0]  %s23, 256, %s25, [#allocation3], 128, 128, 8
    $region5: #{tpu_custom_call.1} parent=1 // pred_fallthru
      _
    // Predicated region
    $region6: #{tpu_custom_call.1} parent=1 // pred_check
      _
    $region7: #{tpu_custom_call.1} parent=1 // pred_check_branch
      %32 = sbr.rel (0) target = $region9
    $region8: #{tpu_custom_call.1} parent=1 // pred_region
      %s33 = sadd.s32 0, 0
      %p34 = scmp.lt.s32.totalorder %s33, 0
      %s35 = scalar_select %p34, %s33, 0
      %s37 = ssub.s32 256, 256
      %38 = vsyncadd [#allocation6], %s37
      %s39 = smul.addr %s35, 128
      %s40 = scalar_lea.hbm %s1, %s39
      %s41 = sshll.u32 [#allocation5], 4
      %s42 = int_to_ptr.vmem [resolvable:$true] %s41
      %47 = dma.hbm_to_vmem [thread:$0]  %s40, 256, %s42, [#allocation6], 128, 128, 8
    $region9: #{tpu_custom_call.1} parent=1 // pred_fallthru
      _
    // Predicated region
    $region10: #{tpu_custom_call.1} parent=1 // pred_check
      _
    $region11: #{tpu_custom_call.1} parent=1 // pred_check_branch
      %49 = sbr.rel (0) target = $region13
    $region12: #{tpu_custom_call.1} parent=1 // pred_region
      %50 = dma.done [#allocation3], 256
    $region13: #{tpu_custom_call.1} parent=1 // pred_fallthru
      _
    // Predicated region
    $region14: #{tpu_custom_call.1} parent=1 // pred_check
      _
    $region15: #{tpu_custom_call.1} parent=1 // pred_check_branch
      %52 = sbr.rel (0) target = $region17
    $region16: #{tpu_custom_call.1} parent=1 // pred_region
      %53 = dma.done [#allocation6], 256
    $region17: #{tpu_custom_call.1} parent=1 // pred_fallthru
      _
    %s54 = sadd.s32 0, 0
    %p55 = scmp.lt.s32.totalorder %s54, 0
    %s56 = scalar_select %p55, %s54, 0
    %s57 = sadd.s32 0, 0
    %p58 = scmp.lt.s32.totalorder %s57, 0
    %s59 = scalar_select %p58, %s57, 0
    %p60 = scmp.eq.s32.totalorder 0, 0
    // Predicated region
    $region18: #{tpu_custom_call.1} parent=1 // pred_check
      %p61 = pneg %p60
    $region19: #{tpu_custom_call.1} parent=1 // pred_check_branch
      %63 = sbr.rel (%p61) target = $region21
    $region20: #{tpu_custom_call.1} parent=1 // pred_region
      %64 = vst [vmem:[#allocation7] sm:$0xff] 0.0
      %65 = vst [vmem:[#allocation7 + $0x8] sm:$0xff] 0.0
      %66 = vst [vmem:[#allocation8] sm:$0xff] 0.0
      %67 = vst [vmem:[#allocation8 + $0x8] sm:$0xff] 0.0
      %68 = vst [vmem:[#allocation10] sm:$0xff] 0.0
      %69 = vst [vmem:[#allocation10 + $0x8] sm:$0xff] 0.0
    $region21: #{tpu_custom_call.1} parent=1 // pred_fallthru
      _
    %v70 = vld [vmem:[#allocation2] sm:$0xff]
    %v71 = vld [vmem:[#allocation2 + $0x8] sm:$0xff]
    %v72 = vld [vmem:[#allocation5] sm:$0xff]
    %v73 = vld [vmem:[#allocation5 + $0x8] sm:$0xff]
    %v74 = vld [vmem:[#allocation7] sm:$0xff]
    %v75 = vld [vmem:[#allocation7 + $0x8] sm:$0xff]
    %v76 = vmul.f32 %v72, %v70
    %v77 = vmul.f32 %v73, %v71
    %v78 = vadd.f32 %v76, 0.0
    %v79 = vadd.f32 %v77, 0.0
    %v80 = vadd.f32 %v74, %v78
    %v81 = vadd.f32 %v75, %v79
    %82 = vst [vmem:[#allocation7] sm:$0xff] %v80
    %83 = vst [vmem:[#allocation7 + $0x8] sm:$0xff] %v81
    %v84 = vld [vmem:[#allocation8] sm:$0xff]
    %v85 = vld [vmem:[#allocation8 + $0x8] sm:$0xff]
    %v86 = vadd.f32 %v72, %v70
    %v87 = vadd.f32 %v73, %v71
    %v88 = vadd.f32 %v86, 0.0
    %v89 = vadd.f32 %v87, 0.0
    %v90 = vadd.f32 %v84, %v88
    %v91 = vadd.f32 %v85, %v89
    %92 = vst [vmem:[#allocation8] sm:$0xff] %v90
    %93 = vst [vmem:[#allocation8 + $0x8] sm:$0xff] %v91
    %v94 = vlog2.pop %v70
    %v95 = vmul.f32 %v94, 0.6931472
    %v96 = vlog2.pop %v71
    %v97 = vmul.f32 %v96, 0.6931472
    %v98 = vmax.f32 %v95, -100.0
    %v99 = vmax.f32 %v97, -100.0
    %v100 = vsub.f32 1.0, %v70
    %v101 = vsub.f32 1.0, %v71
    %v102 = vlog2.pop %v100
    %v103 = vmul.f32 %v102, 0.6931472
    %v104 = vlog2.pop %v101
    %v105 = vmul.f32 %v104, 0.6931472
    %v106 = vmax.f32 %v103, -100.0
    %v107 = vmax.f32 %v105, -100.0
    %v108 = vsub.f32 %v98, %v106
    %v109 = vsub.f32 %v99, %v107
    %v110 = vmul.f32 %v72, %v108
    %v111 = vmul.f32 %v73, %v109
    %v112 = vadd.f32 %v106, %v110
    %v113 = vadd.f32 %v107, %v111
    %v114 = vld [vmem:[#allocation10] sm:$0xff]
    %v115 = vld [vmem:[#allocation10 + $0x8] sm:$0xff]
    %v116 = vadd.f32 %v112, 0.0
    %v117 = vadd.f32 %v113, 0.0
    %v118 = vadd.f32 %v114, %v116
    %v119 = vadd.f32 %v115, %v117
    %120 = vst [vmem:[#allocation10] sm:$0xff] %v118
    %121 = vst [vmem:[#allocation10 + $0x8] sm:$0xff] %v119
    // Predicated region
    $region22: #{tpu_custom_call.1} parent=1 // pred_check
      _
    $region23: #{tpu_custom_call.1} parent=1 // pred_check_branch
      %123 = sbr.rel (0) target = $region25
    $region24: #{tpu_custom_call.1} parent=1 // pred_region
      %s125 = ssub.s32 256, 256
      %126 = vsyncadd [#allocation4], %s125
      %s127 = sshll.u32 [#allocation7], 4
      %s128 = int_to_ptr.vmem [resolvable:$true] %s127
      %133 = dma.vmem_to_hbm [thread:$0]  %s128, 256, %s2, [#allocation4], 128, 128, 8
    $region25: #{tpu_custom_call.1} parent=1 // pred_fallthru
      _
    // Predicated region
    $region26: #{tpu_custom_call.1} parent=1 // pred_check
      _
    $region27: #{tpu_custom_call.1} parent=1 // pred_check_branch
      %135 = sbr.rel (0) target = $region29
    $region28: #{tpu_custom_call.1} parent=1 // pred_region
      %s137 = ssub.s32 256, 256
      %138 = vsyncadd [#allocation9], %s137
      %s139 = sshll.u32 [#allocation8], 4
      %s140 = int_to_ptr.vmem [resolvable:$true] %s139
      %145 = dma.vmem_to_hbm [thread:$0]  %s140, 256, %s3, [#allocation9], 128, 128, 8
    $region29: #{tpu_custom_call.1} parent=1 // pred_fallthru
      _
    // Predicated region
    $region30: #{tpu_custom_call.1} parent=1 // pred_check
      _
    $region31: #{tpu_custom_call.1} parent=1 // pred_check_branch
      %147 = sbr.rel (0) target = $region33
    $region32: #{tpu_custom_call.1} parent=1 // pred_region
      %s149 = ssub.s32 256, 256
      %150 = vsyncadd [#allocation9], %s149
      %s151 = sshll.u32 [#allocation10], 4
      %s152 = int_to_ptr.vmem [resolvable:$true] %s151
      %157 = dma.vmem_to_hbm [thread:$0]  %s152, 256, %s4, [#allocation9], 128, 128, 8
    $region33: #{tpu_custom_call.1} parent=1 // pred_fallthru
      _
    // Predicated region
    $region34: #{tpu_custom_call.1} parent=1 // pred_check
      _
    $region35: #{tpu_custom_call.1} parent=1 // pred_check_branch
      %159 = sbr.rel (0) target = $region37
    $region36: #{tpu_custom_call.1} parent=1 // pred_region
      %160 = dma.done [#allocation4], 256
    $region37: #{tpu_custom_call.1} parent=1 // pred_fallthru
      _
    // Predicated region
    $region38: #{tpu_custom_call.1} parent=1 // pred_check
      _
    $region39: #{tpu_custom_call.1} parent=1 // pred_check_branch
      %162 = sbr.rel (0) target = $region41
    $region40: #{tpu_custom_call.1} parent=1 // pred_region
      %163 = dma.done [#allocation9], 256
    $region41: #{tpu_custom_call.1} parent=1 // pred_fallthru
      _
    // Predicated region
    $region42: #{tpu_custom_call.1} parent=1 // pred_check
      _
    $region43: #{tpu_custom_call.1} parent=1 // pred_check_branch
      %165 = sbr.rel (0) target = $region45
    $region44: #{tpu_custom_call.1} parent=1 // pred_region
      %166 = dma.done [#allocation9], 256
    $region45: #{tpu_custom_call.1} parent=1 // pred_fallthru
      _
    %167 = vsyncpa [#allocation3], 1
    %168 = vsyncpa [#allocation6], 1
    %169 = vsyncpa [#allocation4], 1
    %170 = vsyncpa [#allocation9], 1

</llo_original>
